<compile_context>
chip_gen: v5e
topology: v5e:2x2
jax: 0.10.0
libtpu: 0.0.40
codegen_flags: <defaults>
</compile_context>

<pallas_src>
import functools

import jax
import jax.numpy as jnp
from jax.experimental import pallas as pl
from jax.experimental.pallas import tpu as pltpu

LANE = 128          # TPU lane width: pad every feature dim to this
MAX_BATCH_TILE = 512  # rows per grid step (well above the ~0.35us/step overhead floor)


def _round_up(n, m):
    return ((n + m - 1) // m) * m


def _mlp_kernel(x_ref, w1_ref, b1_ref, w2_ref, b2_ref, w3_ref, b3_ref, o_ref):
    # One fused step over a (TB, 128) batch tile: 3 MXU matmuls + biases + 2 ReLUs.
    # All feature dims are already 128 wide, so every dot is a full-tile MXU op and the
    # final store is lane-dense (unmasked).
    x = x_ref[...]
    h1 = jnp.dot(x, w1_ref[...], preferred_element_type=jnp.float32) + b1_ref[...]
    h1 = jnp.maximum(h1, 0.0)
    h2 = jnp.dot(h1.astype(w2_ref.dtype), w2_ref[...],
                 preferred_element_type=jnp.float32) + b2_ref[...]
    h2 = jnp.maximum(h2, 0.0)
    out = jnp.dot(h2.astype(w3_ref.dtype), w3_ref[...],
                  preferred_element_type=jnp.float32) + b3_ref[...]
    o_ref[...] = out.astype(o_ref.dtype)


@functools.partial(jax.jit, static_argnames=("n_actions", "use_bf16"))
def policy_network_forward(x, w1, b1, w2, b2, w3, b3, *, n_actions, use_bf16=False):
    """x: [B, input_dim] (unpadded). Weights/biases: lane-padded ([*, 128] / [1, 128]).
    Returns logits [B, n_actions] in float32."""
    B, in_dim = x.shape
    in_pad = w1.shape[0]
    out_pad = w3.shape[1]

    # Batch tiling: pad B up to a multiple of the batch tile (>= 8 sublanes).
    b8 = _round_up(max(B, 1), 8)
    tb = min(MAX_BATCH_TILE, b8)
    b_pad = _round_up(B, tb)

    cdt = jnp.bfloat16 if use_bf16 else jnp.float32
    xp = jnp.pad(x.astype(cdt), ((0, b_pad - B), (0, in_pad - in_dim)))

    grid = (b_pad // tb,)
    out = pl.pallas_call(
        _mlp_kernel,
        out_shape=jax.ShapeDtypeStruct((b_pad, out_pad), jnp.float32),
        grid=grid,
        in_specs=[
            # Activation stream: one (tb, 128) tile per grid step (auto double-buffered).
            pl.BlockSpec((tb, in_pad), lambda i: (i, 0)),
            # Weights / biases: whole-array blocks whose block index never changes,
            # so Pallas keeps them VMEM-resident across all grid steps.
            pl.BlockSpec(w1.shape, lambda i: (0, 0)),
            pl.BlockSpec(b1.shape, lambda i: (0, 0)),
            pl.BlockSpec(w2.shape, lambda i: (0, 0)),
            pl.BlockSpec(b2.shape, lambda i: (0, 0)),
            pl.BlockSpec(w3.shape, lambda i: (0, 0)),
            pl.BlockSpec(b3.shape, lambda i: (0, 0)),
        ],
        out_specs=pl.BlockSpec((tb, out_pad), lambda i: (i, 0)),
        compiler_params=pltpu.CompilerParams(
            dimension_semantics=("parallel",)),  # shard batch across v7x's 2 TCs
    )(xp, w1.astype(cdt), b1, w2.astype(cdt), b2, w3.astype(cdt), b3)

    # Slice away batch padding and the lane padding of the logits dim.
    return out[:B, :n_actions]


def init_policy_params(key, input_dim, fc1_dims, fc2_dims, n_actions):
    """nn.Linear-style init: U(-1/sqrt(fan_in), 1/sqrt(fan_in)), weights stored as
    [in, out] (transposed vs. PyTorch) and zero-padded so every feature dim is 128."""
    def linear(k, fan_in, fan_out):
        kw, kb = jax.random.split(k)
        bound = 1.0 / (float(fan_in) ** 0.5)
        w = jax.random.uniform(kw, (fan_in, fan_out), jnp.float32, -bound, bound)
        b = jax.random.uniform(kb, (1, fan_out), jnp.float32, -bound, bound)
        w = jnp.pad(w, ((0, _round_up(fan_in, LANE) - fan_in),
                        (0, _round_up(fan_out, LANE) - fan_out)))
        b = jnp.pad(b, ((0, 0), (0, _round_up(fan_out, LANE) - fan_out)))
        return w, b

    k1, k2, k3 = jax.random.split(key, 3)
    w1, b1 = linear(k1, input_dim, fc1_dims)
    w2, b2 = linear(k2, fc1_dims, fc2_dims)
    w3, b3 = linear(k3, fc2_dims, n_actions)
    return w1, b1, w2, b2, w3, b3


def _reference_forward(x, w1, b1, w2, b2, w3, b3, n_actions):
    # Pure-JAX reference on the (padded) parameters; padded cols/rows are zero so the
    # math is identical to the unpadded nn.Linear stack.
    in_dim = x.shape[1]
    h1 = jnp.maximum(x @ w1[:in_dim] + b1, 0.0)
    h2 = jnp.maximum(h1 @ w2 + b2, 0.0)
    return (h2 @ w3 + b3)[:, :n_actions]


if __name__ == "__main__":
    # Small shapes consistent with the module: input_dims=(16,), fc1=32, fc2=32, n_actions=4
    batch, input_dim, fc1_dims, fc2_dims, n_actions = 8, 16, 32, 32, 4

    key = jax.random.PRNGKey(0)
    k_params, k_x = jax.random.split(key)
    params = init_policy_params(k_params, input_dim, fc1_dims, fc2_dims, n_actions)
    x = jax.random.normal(k_x, (batch, input_dim), jnp.float32)

    out = policy_network_forward(x, *params, n_actions=n_actions, use_bf16=False)
    out = jax.block_until_ready(out)

    ref = _reference_forward(x, *params, n_actions)
    assert out.shape == (batch, n_actions)
    assert jnp.allclose(out, ref, atol=1e-5, rtol=1e-5)

    print("KERNEL_OK")
</pallas_src>

<mosaic_0001>
module attributes {stable_mosaic.version = 11 : i64} {
  func.func @_mlp_kernel(%arg0: i32, %arg1: memref<8x128xf32, #tpu.memory_space<vmem>>, %arg2: memref<128x128xf32, #tpu.memory_space<vmem>>, %arg3: memref<1x128xf32, #tpu.memory_space<vmem>>, %arg4: memref<128x128xf32, #tpu.memory_space<vmem>>, %arg5: memref<1x128xf32, #tpu.memory_space<vmem>>, %arg6: memref<128x128xf32, #tpu.memory_space<vmem>>, %arg7: memref<1x128xf32, #tpu.memory_space<vmem>>, %arg8: memref<8x128xf32, #tpu.memory_space<vmem>>) attributes {dimension_semantics = [#tpu.dimension_semantics<parallel>], iteration_bounds = array<i64: 1>, scalar_prefetch = 0 : i64, scratch_operands = 0 : i64, tpu.core_type = #tpu.core_type<tc>, window_params = [{transform_indices = @transform_0, window_bounds = array<i64: 8, 128>}, {pipeline_mode = #tpu.pipeline_mode<synchronous>, transform_indices = @transform_1, window_bounds = array<i64: 128, 128>}, {pipeline_mode = #tpu.pipeline_mode<synchronous>, transform_indices = @transform_2, window_bounds = array<i64: 1, 128>}, {pipeline_mode = #tpu.pipeline_mode<synchronous>, transform_indices = @transform_3, window_bounds = array<i64: 128, 128>}, {pipeline_mode = #tpu.pipeline_mode<synchronous>, transform_indices = @transform_4, window_bounds = array<i64: 1, 128>}, {pipeline_mode = #tpu.pipeline_mode<synchronous>, transform_indices = @transform_5, window_bounds = array<i64: 128, 128>}, {pipeline_mode = #tpu.pipeline_mode<synchronous>, transform_indices = @transform_6, window_bounds = array<i64: 1, 128>}, {transform_indices = @transform_7, window_bounds = array<i64: 8, 128>}]} {
    %c0 = arith.constant 0 : index
    %c0_0 = arith.constant 0 : index
    %0 = vector.load %arg1[%c0, %c0_0] : memref<8x128xf32, #tpu.memory_space<vmem>>, vector<8x128xf32>
    %c0_1 = arith.constant 0 : index
    %c0_2 = arith.constant 0 : index
    %1 = vector.load %arg2[%c0_1, %c0_2] : memref<128x128xf32, #tpu.memory_space<vmem>>, vector<128x128xf32>
    %cst = arith.constant dense<0.000000e+00> : vector<8x128xf32>
    %2 = tpu.matmul %0, %1, %cst {dimension_numbers = #tpu.dot_dimension_numbers<[1], [0], [0], [1], [0, 0, 1, 1], [], []>} : vector<8x128xf32>, vector<128x128xf32>, vector<8x128xf32> -> vector<8x128xf32>
    %c0_3 = arith.constant 0 : index
    %c0_4 = arith.constant 0 : index
    %3 = vector.load %arg3[%c0_3, %c0_4] : memref<1x128xf32, #tpu.memory_space<vmem>>, vector<1x128xf32>
    %4 = vector.broadcast %3 : vector<1x128xf32> to vector<8x128xf32>
    %5 = arith.addf %2, %4 : vector<8x128xf32>
    %cst_5 = arith.constant 0.000000e+00 : f32
    %6 = vector.broadcast %cst_5 : f32 to vector<8x128xf32>
    %7 = arith.maximumf %5, %6 : vector<8x128xf32>
    %c0_6 = arith.constant 0 : index
    %c0_7 = arith.constant 0 : index
    %8 = vector.load %arg4[%c0_6, %c0_7] : memref<128x128xf32, #tpu.memory_space<vmem>>, vector<128x128xf32>
    %cst_8 = arith.constant dense<0.000000e+00> : vector<8x128xf32>
    %9 = tpu.matmul %7, %8, %cst_8 {dimension_numbers = #tpu.dot_dimension_numbers<[1], [0], [0], [1], [0, 0, 1, 1], [], []>} : vector<8x128xf32>, vector<128x128xf32>, vector<8x128xf32> -> vector<8x128xf32>
    %c0_9 = arith.constant 0 : index
    %c0_10 = arith.constant 0 : index
    %10 = vector.load %arg5[%c0_9, %c0_10] : memref<1x128xf32, #tpu.memory_space<vmem>>, vector<1x128xf32>
    %11 = vector.broadcast %10 : vector<1x128xf32> to vector<8x128xf32>
    %12 = arith.addf %9, %11 : vector<8x128xf32>
    %cst_11 = arith.constant 0.000000e+00 : f32
    %13 = vector.broadcast %cst_11 : f32 to vector<8x128xf32>
    %14 = arith.maximumf %12, %13 : vector<8x128xf32>
    %c0_12 = arith.constant 0 : index
    %c0_13 = arith.constant 0 : index
    %15 = vector.load %arg6[%c0_12, %c0_13] : memref<128x128xf32, #tpu.memory_space<vmem>>, vector<128x128xf32>
    %cst_14 = arith.constant dense<0.000000e+00> : vector<8x128xf32>
    %16 = tpu.matmul %14, %15, %cst_14 {dimension_numbers = #tpu.dot_dimension_numbers<[1], [0], [0], [1], [0, 0, 1, 1], [], []>} : vector<8x128xf32>, vector<128x128xf32>, vector<8x128xf32> -> vector<8x128xf32>
    %c0_15 = arith.constant 0 : index
    %c0_16 = arith.constant 0 : index
    %17 = vector.load %arg7[%c0_15, %c0_16] : memref<1x128xf32, #tpu.memory_space<vmem>>, vector<1x128xf32>
    %18 = vector.broadcast %17 : vector<1x128xf32> to vector<8x128xf32>
    %19 = arith.addf %16, %18 : vector<8x128xf32>
    %c0_17 = arith.constant 0 : index
    %c0_18 = arith.constant 0 : index
    %20 = vector.load %arg8[%c0_17, %c0_18] : memref<8x128xf32, #tpu.memory_space<vmem>>, vector<8x128xf32>
    tpu.vector_store %arg8[%c0_17, %c0_18], %19 {strides = array<i32>} : memref<8x128xf32, #tpu.memory_space<vmem>>, vector<8x128xf32>,
    return
  }
  func.func @transform_0(%arg0: i32) -> (i32, i32) {
    %c0_i32 = arith.constant 0 : i32
    %c0_i32_0 = arith.constant 0 : i32
    return %arg0, %c0_i32 : i32, i32
  }
  func.func @transform_1(%arg0: i32) -> (i32, i32) {
    %c0_i32 = arith.constant 0 : i32
    %c0_i32_0 = arith.constant 0 : i32
    %c0_i32_1 = arith.constant 0 : i32
    return %c0_i32, %c0_i32_0 : i32, i32
  }
  func.func @transform_2(%arg0: i32) -> (i32, i32) {
    %c0_i32 = arith.constant 0 : i32
    %c0_i32_0 = arith.constant 0 : i32
    %c0_i32_1 = arith.constant 0 : i32
    return %c0_i32, %c0_i32_0 : i32, i32
  }
  func.func @transform_3(%arg0: i32) -> (i32, i32) {
    %c0_i32 = arith.constant 0 : i32
    %c0_i32_0 = arith.constant 0 : i32
    %c0_i32_1 = arith.constant 0 : i32
    return %c0_i32, %c0_i32_0 : i32, i32
  }
  func.func @transform_4(%arg0: i32) -> (i32, i32) {
    %c0_i32 = arith.constant 0 : i32
    %c0_i32_0 = arith.constant 0 : i32
    %c0_i32_1 = arith.constant 0 : i32
    return %c0_i32, %c0_i32_0 : i32, i32
  }
  func.func @transform_5(%arg0: i32) -> (i32, i32) {
    %c0_i32 = arith.constant 0 : i32
    %c0_i32_0 = arith.constant 0 : i32
    %c0_i32_1 = arith.constant 0 : i32
    return %c0_i32, %c0_i32_0 : i32, i32
  }
  func.func @transform_6(%arg0: i32) -> (i32, i32) {
    %c0_i32 = arith.constant 0 : i32
    %c0_i32_0 = arith.constant 0 : i32
    %c0_i32_1 = arith.constant 0 : i32
    return %c0_i32, %c0_i32_0 : i32, i32
  }
  func.func @transform_7(%arg0: i32) -> (i32, i32) {
    %c0_i32 = arith.constant 0 : i32
    %c0_i32_0 = arith.constant 0 : i32
    return %arg0, %c0_i32 : i32, i32
  }
}

</mosaic_0001>

<llo_original>
// kernel: policy_network_forward.1
$region0: #{policy_network_forward.1}
  #allocation0 [shape = 'u32[]', space=smem, size = 0x4, offset = 0x4, fixed_abs, tag = 'smem constant byte address 0x4 - core index']
  #allocation1 [shape = 'u32[72,128]{1,0:T(1,128)}', space=vmem, size = 0x9000, scoped, tag = 'internal scratch']
  %s0 = inlined_call_operand.vmem [shape: f32[8,128], index: 0, kind: input, shape index: {}]
  %s1 = inlined_call_operand.hbm [shape: f32[128,128], index: 1, kind: input, shape index: {}]
  %s2 = inlined_call_operand.vmem [shape: f32[1,128], index: 2, kind: input, shape index: {}]
  %s3 = inlined_call_operand.hbm [shape: f32[128,128], index: 3, kind: input, shape index: {}]
  %s4 = inlined_call_operand.vmem [shape: f32[1,128], index: 4, kind: input, shape index: {}]
  %s5 = inlined_call_operand.hbm [shape: f32[128,128], index: 5, kind: input, shape index: {}]
  %s6 = inlined_call_operand.vmem [shape: f32[1,128], index: 6, kind: input, shape index: {}]
  %s7 = inlined_call_operand.vmem [shape: f32[8,128], index: 7, kind: output, shape index: {}]
  %s8 = sld [smem:[#allocation0]]
  $region50: #{policy_network_forward.1} parent=0
    _
  %s10 = ssub.s32 1, %s8
  %s11 = scalar_select 0, %s10, %s8
  $region1: #{policy_network_forward.1} parent=0
    #allocation2 [shape = 'u8[65536]{0}', space=vmem, size = 0x10000, scoped, tag = 'input window, operand 1, single buffered']
    #allocation3 [shape = 's32[1]{0}', space=sflag, size = 0x4, scoped, tag = 'scoped memory for policy_network_forward.1']
    #allocation4 [shape = 'u8[65536]{0}', space=vmem, size = 0x10000, scoped, tag = 'input window, operand 3, single buffered']
    #allocation5 [shape = 's32[1]{0}', space=sflag, size = 0x4, scoped, tag = 'scoped memory for policy_network_forward.1']
    #allocation6 [shape = 'u8[65536]{0}', space=vmem, size = 0x10000, scoped, tag = 'input window, operand 5, single buffered']
    %12 = vsyncpa [#allocation3], 0
    %13 = vsyncpa [#allocation5], 0
    // Predicated region
    $region2: #{policy_network_forward.1} parent=1 // pred_check
      _
    $region3: #{policy_network_forward.1} parent=1 // pred_check_branch
      %15 = sbr.rel (0) target = $region5
    $region4: #{policy_network_forward.1} parent=1 // pred_region
      _
    $region5: #{policy_network_forward.1} parent=1 // pred_fallthru
      _
    // Predicated region
    $region6: #{policy_network_forward.1} parent=1 // pred_check
      _
    $region7: #{policy_network_forward.1} parent=1 // pred_check_branch
      %17 = sbr.rel (0) target = $region9
    $region8: #{policy_network_forward.1} parent=1 // pred_region
      %19 = vsyncadd [#allocation3], 0
      %s20 = sshll.u32 %s1, 4
      %s21 = int_to_ptr.hbm [resolvable:$true] %s20
      %s22 = sshll.u32 [#allocation2], 4
      %s23 = int_to_ptr.vmem [resolvable:$true] %s22
      %28 = dma.hbm_to_vmem [thread:$0]  %s21, 2048, %s23, [#allocation3], 128, 128, 8
    $region9: #{policy_network_forward.1} parent=1 // pred_fallthru
      _
    // Predicated region
    $region10: #{policy_network_forward.1} parent=1 // pred_check
      _
    $region11: #{policy_network_forward.1} parent=1 // pred_check_branch
      %30 = sbr.rel (0) target = $region13
    $region12: #{policy_network_forward.1} parent=1 // pred_region
      _
    $region13: #{policy_network_forward.1} parent=1 // pred_fallthru
      _
    // Predicated region
    $region14: #{policy_network_forward.1} parent=1 // pred_check
      _
    $region15: #{policy_network_forward.1} parent=1 // pred_check_branch
      %32 = sbr.rel (0) target = $region17
    $region16: #{policy_network_forward.1} parent=1 // pred_region
      %34 = vsyncadd [#allocation5], 0
      %s35 = sshll.u32 %s3, 4
      %s36 = int_to_ptr.hbm [resolvable:$true] %s35
      %s37 = sshll.u32 [#allocation4], 4
      %s38 = int_to_ptr.vmem [resolvable:$true] %s37
      %43 = dma.hbm_to_vmem [thread:$0]  %s36, 2048, %s38, [#allocation5], 128, 128, 8
    $region17: #{policy_network_forward.1} parent=1 // pred_fallthru
      _
    // Predicated region
    $region18: #{policy_network_forward.1} parent=1 // pred_check
      _
    $region19: #{policy_network_forward.1} parent=1 // pred_check_branch
      %45 = sbr.rel (0) target = $region21
    $region20: #{policy_network_forward.1} parent=1 // pred_region
      _
    $region21: #{policy_network_forward.1} parent=1 // pred_fallthru
      _
    // Predicated region
    $region22: #{policy_network_forward.1} parent=1 // pred_check
      _
    $region23: #{policy_network_forward.1} parent=1 // pred_check_branch
      %47 = sbr.rel (0) target = $region25
    $region24: #{policy_network_forward.1} parent=1 // pred_region
      %49 = vsyncadd [#allocation5], 0
      %s50 = sshll.u32 %s5, 4
      %s51 = int_to_ptr.hbm [resolvable:$true] %s50
      %s52 = sshll.u32 [#allocation6], 4
      %s53 = int_to_ptr.vmem [resolvable:$true] %s52
      %58 = dma.hbm_to_vmem [thread:$0]  %s51, 2048, %s53, [#allocation5], 128, 128, 8
    $region25: #{policy_network_forward.1} parent=1 // pred_fallthru
      _
    // Predicated region
    $region26: #{policy_network_forward.1} parent=1 // pred_check
      _
    $region27: #{policy_network_forward.1} parent=1 // pred_check_branch
      %60 = sbr.rel (0) target = $region29
    $region28: #{policy_network_forward.1} parent=1 // pred_region
      _
    $region29: #{policy_network_forward.1} parent=1 // pred_fallthru
      _
    // Predicated region
    $region30: #{policy_network_forward.1} parent=1 // pred_check
      _
    $region31: #{policy_network_forward.1} parent=1 // pred_check_branch
      %62 = sbr.rel (0) target = $region33
    $region32: #{policy_network_forward.1} parent=1 // pred_region
      %64 = dma.done [#allocation3], 2048
    $region33: #{policy_network_forward.1} parent=1 // pred_fallthru
      _
    // Predicated region
    $region34: #{policy_network_forward.1} parent=1 // pred_check
      _
    $region35: #{policy_network_forward.1} parent=1 // pred_check_branch
      %66 = sbr.rel (0) target = $region37
    $region36: #{policy_network_forward.1} parent=1 // pred_region
      %68 = dma.done [#allocation5], 2048
    $region37: #{policy_network_forward.1} parent=1 // pred_fallthru
      _
    // Predicated region
    $region38: #{policy_network_forward.1} parent=1 // pred_check
      _
    $region39: #{policy_network_forward.1} parent=1 // pred_check_branch
      %70 = sbr.rel (0) target = $region41
    $region40: #{policy_network_forward.1} parent=1 // pred_region
      %72 = dma.done [#allocation5], 2048
    $region41: #{policy_network_forward.1} parent=1 // pred_fallthru
      _
    %v73 = vld [vmem:[%s0] sm:$0xff]
    %v74 = vld [vmem:[#allocation2] sm:$0xff]
    %v75 = vld [vmem:[#allocation2 + $0x8] sm:$0xff]
    %v76 = vld [vmem:[#allocation2 + $0x10] sm:$0xff]
    %v77 = vld [vmem:[#allocation2 + $0x18] sm:$0xff]
    %v78 = vld [vmem:[#allocation2 + $0x20] sm:$0xff]
    %v79 = vld [vmem:[#allocation2 + $0x28] sm:$0xff]
    %v80 = vld [vmem:[#allocation2 + $0x30] sm:$0xff]
    %v81 = vld [vmem:[#allocation2 + $0x38] sm:$0xff]
    %v82 = vld [vmem:[#allocation2 + $0x40] sm:$0xff]
    %v83 = vld [vmem:[#allocation2 + $0x48] sm:$0xff]
    %v84 = vld [vmem:[#allocation2 + $0x50] sm:$0xff]
    %v85 = vld [vmem:[#allocation2 + $0x58] sm:$0xff]
    %v86 = vld [vmem:[#allocation2 + $0x60] sm:$0xff]
    %v87 = vld [vmem:[#allocation2 + $0x68] sm:$0xff]
    %v88 = vld [vmem:[#allocation2 + $0x70] sm:$0xff]
    %v89 = vld [vmem:[#allocation2 + $0x78] sm:$0xff]
    %v90 = vld [vmem:[%s2] sm:$0x1]
    %v92 = vperm.slane %v90, 0
    %94 = vmatpush.msra.mxu0 %v89
    %95 = vmatpush.msra.mxu0 %v88
    %96 = vmatpush.msra.mxu0 %v87
    %97 = vmatpush.msra.mxu0 %v86
    %98 = vmatpush.msra.mxu0 %v85
    %99 = vmatpush.msra.mxu0 %v84
    %100 = vmatpush.msra.mxu0 %v83
    %101 = vmatpush.msra.mxu0 %v82
    %102 = vmatpush.msra.mxu0 %v81
    %103 = vmatpush.msra.mxu0 %v80
    %104 = vmatpush.msra.mxu0 %v79
    %105 = vmatpush.msra.mxu0 %v78
    %106 = vmatpush.msra.mxu0 %v77
    %107 = vmatpush.msra.mxu0 %v76
    %108 = vmatpush.msra.mxu0 %v75
    %109 = vmatpush.msra.mxu0 %v74
    %110 = vmatmul.f32.gmra.mxu0 %v73
    %v111 = vpop.f32.mrf.mxu0
    %v112 = vadd.f32 %v92, %v111
    %113 = vdwg.mxu0
    %v114 = vmax.f32 %v112, 0.0
    %v115 = vld [vmem:[#allocation4] sm:$0xff]
    %v116 = vld [vmem:[#allocation4 + $0x8] sm:$0xff]
    %v117 = vld [vmem:[#allocation4 + $0x10] sm:$0xff]
    %v118 = vld [vmem:[#allocation4 + $0x18] sm:$0xff]
    %v119 = vld [vmem:[#allocation4 + $0x20] sm:$0xff]
    %v120 = vld [vmem:[#allocation4 + $0x28] sm:$0xff]
    %v121 = vld [vmem:[#allocation4 + $0x30] sm:$0xff]
    %v122 = vld [vmem:[#allocation4 + $0x38] sm:$0xff]
    %v123 = vld [vmem:[#allocation4 + $0x40] sm:$0xff]
    %v124 = vld [vmem:[#allocation4 + $0x48] sm:$0xff]
    %v125 = vld [vmem:[#allocation4 + $0x50] sm:$0xff]
    %v126 = vld [vmem:[#allocation4 + $0x58] sm:$0xff]
    %v127 = vld [vmem:[#allocation4 + $0x60] sm:$0xff]
    %v128 = vld [vmem:[#allocation4 + $0x68] sm:$0xff]
    %v129 = vld [vmem:[#allocation4 + $0x70] sm:$0xff]
    %v130 = vld [vmem:[#allocation4 + $0x78] sm:$0xff]
    %v131 = vld [vmem:[%s4] sm:$0x1]
    %v133 = vperm.slane %v131, 0
    %135 = vmatpush.msra.mxu0 %v130
    %136 = vmatpush.msra.mxu0 %v129
    %137 = vmatpush.msra.mxu0 %v128
    %138 = vmatpush.msra.mxu0 %v127
    %139 = vmatpush.msra.mxu0 %v126
    %140 = vmatpush.msra.mxu0 %v125
    %141 = vmatpush.msra.mxu0 %v124
    %142 = vmatpush.msra.mxu0 %v123
    %143 = vmatpush.msra.mxu0 %v122
    %144 = vmatpush.msra.mxu0 %v121
    %145 = vmatpush.msra.mxu0 %v120
    %146 = vmatpush.msra.mxu0 %v119
    %147 = vmatpush.msra.mxu0 %v118
    %148 = vmatpush.msra.mxu0 %v117
    %149 = vmatpush.msra.mxu0 %v116
    %150 = vmatpush.msra.mxu0 %v115
    %151 = vmatmul.f32.gmra.mxu0 %v114
    %v152 = vpop.f32.mrf.mxu0
    %v153 = vadd.f32 %v133, %v152
    %154 = vdwg.mxu0
    %v155 = vmax.f32 %v153, 0.0
    %v156 = vld [vmem:[#allocation6] sm:$0xff]
    %v157 = vld [vmem:[#allocation6 + $0x8] sm:$0xff]
    %v158 = vld [vmem:[#allocation6 + $0x10] sm:$0xff]
    %v159 = vld [vmem:[#allocation6 + $0x18] sm:$0xff]
    %v160 = vld [vmem:[#allocation6 + $0x20] sm:$0xff]
    %v161 = vld [vmem:[#allocation6 + $0x28] sm:$0xff]
    %v162 = vld [vmem:[#allocation6 + $0x30] sm:$0xff]
    %v163 = vld [vmem:[#allocation6 + $0x38] sm:$0xff]
    %v164 = vld [vmem:[#allocation6 + $0x40] sm:$0xff]
    %v165 = vld [vmem:[#allocation6 + $0x48] sm:$0xff]
    %v166 = vld [vmem:[#allocation6 + $0x50] sm:$0xff]
    %v167 = vld [vmem:[#allocation6 + $0x58] sm:$0xff]
    %v168 = vld [vmem:[#allocation6 + $0x60] sm:$0xff]
    %v169 = vld [vmem:[#allocation6 + $0x68] sm:$0xff]
    %v170 = vld [vmem:[#allocation6 + $0x70] sm:$0xff]
    %v171 = vld [vmem:[#allocation6 + $0x78] sm:$0xff]
    %v172 = vld [vmem:[%s6] sm:$0x1]
    %v174 = vperm.slane %v172, 0
    %176 = vmatpush.msra.mxu0 %v171
    %177 = vmatpush.msra.mxu0 %v170
    %178 = vmatpush.msra.mxu0 %v169
    %179 = vmatpush.msra.mxu0 %v168
    %180 = vmatpush.msra.mxu0 %v167
    %181 = vmatpush.msra.mxu0 %v166
    %182 = vmatpush.msra.mxu0 %v165
    %183 = vmatpush.msra.mxu0 %v164
    %184 = vmatpush.msra.mxu0 %v163
    %185 = vmatpush.msra.mxu0 %v162
    %186 = vmatpush.msra.mxu0 %v161
    %187 = vmatpush.msra.mxu0 %v160
    %188 = vmatpush.msra.mxu0 %v159
    %189 = vmatpush.msra.mxu0 %v158
    %190 = vmatpush.msra.mxu0 %v157
    %191 = vmatpush.msra.mxu0 %v156
    %192 = vmatmul.f32.gmra.mxu0 %v155
    %v193 = vpop.f32.mrf.mxu0
    %v194 = vadd.f32 %v174, %v193
    %195 = vdwg.mxu0
    %196 = vst [vmem:[%s7] sm:$0xff] %v194
    // Predicated region
    $region42: #{policy_network_forward.1} parent=1 // pred_check
      _
    $region43: #{policy_network_forward.1} parent=1 // pred_check_branch
      %198 = sbr.rel (0) target = $region45
    $region44: #{policy_network_forward.1} parent=1 // pred_region
      _
    $region45: #{policy_network_forward.1} parent=1 // pred_fallthru
      _
    // Predicated region
    $region46: #{policy_network_forward.1} parent=1 // pred_check
      _
    $region47: #{policy_network_forward.1} parent=1 // pred_check_branch
      %200 = sbr.rel (0) target = $region49
    $region48: #{policy_network_forward.1} parent=1 // pred_region
      _
    $region49: #{policy_network_forward.1} parent=1 // pred_fallthru
      _
    %201 = vsyncpa [#allocation3], 1
    %202 = vsyncpa [#allocation5], 1

</llo_original>
